<compile_context>
chip_gen: v7x
topology: tpu7x:2x2x1
jax: 0.10.0
libtpu: 0.0.40
codegen_flags: <defaults>
</compile_context>

<pallas_src>
import numpy as np
import jax
import jax.numpy as jnp
from jax.experimental import pallas as pl
from jax.experimental.pallas import tpu as pltpu

IN_F, H1, H2, H3, OUT = 9, 200, 200, 100, 3

MB    = 8            # samples (rows) per grid step == one sublane tile
LANES = 256          # slab lane width (2 lane-vregs)
H3_P  = 128

# Packed parameter slab (f32, (8,128)-aligned):
#   rows [  0: 16)                 W1  (real   9x200 in [0:9  , 0:200)) -- read row-wise
#   rows [ 16:272)                 W2  (real 200x200 in [0:200, 0:200))
#   rows [272:528) lanes [  0:128) W3  (real 200x100)
#   rows [272:400) lanes [128:256) W4  (real 100x3)
#   rows [528:532)                 b1, b2, b3 (lanes 0:128), b4 (lanes 0:128)
W1_LO, W1_HI = 0, 16
W2_LO, W2_HI = 16, 272
W3_LO, W3_HI = 272, 528
W4_LO, W4_HI = 272, 400
B_ROW        = 528
SLAB_ROWS    = 536


def _mlp_kernel(x_ref, w_ref, out_ref):
    """8 independent samples per step: vectorized feature build + 3 MXU passes."""
    xb = x_ref[...]                          # (MB, 27), one sample per sublane row
    col = lambda j: xb[:, j:j + 1]           # (MB, 1) column slice

    G01, G02, G10 = col(1), col(2), col(3)
    G12, G20, G21 = col(5), col(6), col(7)
    w0, w1, w2    = col(9), col(10), col(11)
    p0, p1, p2    = col(15), col(16), col(17)

    den_a = G10 * p0 + G12 * p2 + 0.05
    den_b = G01 * p1 + G02 * p2 + 0.05
    den_c = G20 * p0 + G21 * p1 + 0.05

    d0 = (w1 * G10) / den_a + (w2 * G20) / den_c
    d1 = (w0 * G01) / den_b + (w2 * G21) / den_c
    d2 = (w0 * G02) / den_b + (w1 * G12) / den_a

    # h1 = w.T @ alpha, alpha row-major in x[18:27]
    h1_0 = w0 * col(18) + w1 * col(21) + w2 * col(24)
    h1_1 = w0 * col(19) + w1 * col(22) + w2 * col(25)
    h1_2 = w0 * col(20) + w1 * col(23) + w2 * col(26)

    feats = (h1_0, h1_1, h1_2, d0, d1, d2, p0, p1, p2)   # 9 x (MB, 1)

    # Layer 1 as a tree-summed weighted sum of W1 rows: no fv lane-scatter,
    # no first MXU pass.  (MB,1) * (1,256) -> (MB,256) broadcasts on the VPU.
    t = [feats[i] * w_ref[W1_LO + i:W1_LO + i + 1, :] for i in range(IN_F)]
    acc = ((t[0] + t[1]) + (t[2] + t[3])) + ((t[4] + t[5]) + (t[6] + t[7])) + t[8]
    h = jnp.maximum(acc + w_ref[B_ROW + 0:B_ROW + 1, :], 0.0)               # (MB, 256)

    h = jnp.maximum(
        jnp.dot(h, w_ref[W2_LO:W2_HI, :], preferred_element_type=jnp.float32)
        + w_ref[B_ROW + 1:B_ROW + 2, :], 0.0)                               # (MB, 256)
    h = jnp.maximum(
        jnp.dot(h, w_ref[W3_LO:W3_HI, 0:H3_P], preferred_element_type=jnp.float32)
        + w_ref[B_ROW + 2:B_ROW + 3, 0:H3_P], 0.0)                          # (MB, 128)
    out_ref[...] = (
        jnp.dot(h, w_ref[W4_LO:W4_HI, H3_P:2 * H3_P], preferred_element_type=jnp.float32)
        + w_ref[B_ROW + 3:B_ROW + 4, 0:H3_P])                               # (MB, 128)


def _forward_padded(xs, w_slab):
    """xs: (T, 27) with T a multiple of MB.  Returns (T, 3)."""
    T = xs.shape[0]
    steps = T // MB
    cost = pl.CostEstimate(
        flops=2 * T * (IN_F * H1 + H1 * H2 + H2 * H3 + H3 * OUT),
        transcendentals=0,
        bytes_accessed=4 * (SLAB_ROWS * LANES + T * 27 + T * H3_P))
    out = pl.pallas_call(
        _mlp_kernel,
        out_shape=jax.ShapeDtypeStruct((T, H3_P), jnp.float32),
        grid=(steps,),
        in_specs=[
            pl.BlockSpec((MB, 27), lambda i: (i, 0)),            # per-step sample rows
            pl.BlockSpec((SLAB_ROWS, LANES), lambda i: (0, 0)),  # params stay VMEM-resident
        ],
        out_specs=pl.BlockSpec((MB, H3_P), lambda i: (i, 0)),
        compiler_params=pltpu.CompilerParams(
            dimension_semantics=("parallel",)),                  # both TCs on v7x
        cost_estimate=cost,
    )(xs, w_slab)
    return out[:, :OUT]


@jax.jit
def forward(x, w_slab):
    """Exact module semantics: only x[0] is consumed, output shape (1, 3)."""
    row = x[:1, :]
    pad = jnp.ones((MB - 1, x.shape[1]), x.dtype)   # benign filler rows
    out = _forward_padded(jnp.concatenate([row, pad], axis=0), w_slab)
    return out[:1, :]


@jax.jit
def forward_steps(xs, w_slab):
    """Grid-fused iteration loop: one forward pass per row of xs, one launch."""
    T = xs.shape[0]
    pad = (-T) % MB
    if pad:
        xs = jnp.concatenate([xs, jnp.ones((pad, xs.shape[1]), xs.dtype)], axis=0)
    return _forward_padded(xs, w_slab)[:T]


def init_params(key):
    """PyTorch-Linear-style init: U(-1/sqrt(fan_in), +1/sqrt(fan_in))."""
    def linear(k, fan_in, fan_out):
        k1, k2 = jax.random.split(k)
        bound = 1.0 / np.sqrt(fan_in)
        W = jax.random.uniform(k1, (fan_in, fan_out), jnp.float32, -bound, bound)
        b = jax.random.uniform(k2, (fan_out,), jnp.float32, -bound, bound)
        return W, b

    k1, k2, k3, k4 = jax.random.split(key, 4)
    w1, b1 = linear(k1, IN_F, H1)
    w2, b2 = linear(k2, H1, H2)
    w3, b3 = linear(k3, H2, H3)
    w4, b4 = linear(k4, H3, OUT)
    return dict(w1=w1, b1=b1, w2=w2, b2=b2, w3=w3, b3=b3, w4=w4, b4=b4)


def pack_params(p):
    """One-time packing of all weights & biases into a single aligned slab."""
    s = jnp.zeros((SLAB_ROWS, LANES), jnp.float32)
    s = s.at[W1_LO:W1_LO + IN_F, 0:H1].set(p["w1"])
    s = s.at[W2_LO:W2_LO + H1, 0:H2].set(p["w2"])
    s = s.at[W3_LO:W3_LO + H2, 0:H3].set(p["w3"])
    s = s.at[W4_LO:W4_LO + H3, H3_P:H3_P + OUT].set(p["w4"])
    s = s.at[B_ROW + 0, 0:H1].set(p["b1"])
    s = s.at[B_ROW + 1, 0:H2].set(p["b2"])
    s = s.at[B_ROW + 2, 0:H3].set(p["b3"])
    s = s.at[B_ROW + 3, 0:OUT].set(p["b4"])
    return s


def forward_ref(x, params):
    """Pure-JAX reference replicating the PyTorch forward, for validation."""
    r = x[0]
    G01, G02, G10, G12, G20, G21 = r[1], r[2], r[3], r[5], r[6], r[7]
    p0, p1, p2 = r[15], r[16], r[17]
    w = jnp.reshape(r[9:12], (3, 1))
    alpha = jnp.reshape(r[18:27], (3, 3))
    p_bar = jnp.reshape(r[15:18], (3, 1))

    d0 = w[1, 0] * G10 / (G10 * p0 + G12 * p2 + 0.05) + \
         w[2, 0] * G20 / (G20 * p0 + G21 * p1 + 0.05)
    d1 = w[0, 0] * G01 / (G01 * p1 + G02 * p2 + 0.05) + \
         w[2, 0] * G21 / (G20 * p0 + G21 * p1 + 0.05)
    d2 = w[0, 0] * G02 / (G01 * p1 + G02 * p2 + 0.05) + \
         w[1, 0] * G12 / (G10 * p0 + G12 * p2 + 0.05)
    d = jnp.stack([d0, d1, d2]).reshape(1, 3)

    fv = jnp.concatenate([w.T @ alpha, d, p_bar.T], axis=1)   # (1, 9)
    h = jnp.maximum(fv @ params["w1"] + params["b1"], 0.0)
    h = jnp.maximum(h @ params["w2"] + params["b2"], 0.0)
    h = jnp.maximum(h @ params["w3"] + params["b3"], 0.0)
    return h @ params["w4"] + params["b4"]


if __name__ == "__main__":
    key = jax.random.PRNGKey(0)
    k_x, k_p, k_b = jax.random.split(key, 3)

    # (batch, 27) features; positive values keep the d0/d1/d2 denominators sane.
    x = jax.random.uniform(k_x, (2, 27), jnp.float32, 0.1, 1.0)
    params = init_params(k_p)
    w_slab = pack_params(params)            # one-time pad/pack (not per call)

    # 1) Module-faithful single forward: uses x[0], returns (1, 3).
    out = jax.block_until_ready(forward(x, w_slab))
    ref = forward_ref(x, params)
    assert out.shape == (1, 3)
    np.testing.assert_allclose(np.asarray(out), np.asarray(ref),
                               rtol=1e-4, atol=1e-4)

    # 2) Grid-fused iteration loop: 16 independent forward calls in one launch.
    xs = jax.random.uniform(k_b, (16, 27), jnp.float32, 0.1, 1.0)
    outs = jax.block_until_ready(forward_steps(xs, w_slab))
    refs = jnp.concatenate([forward_ref(xs[i:i + 1], params) for i in range(16)],
                           axis=0)
    assert outs.shape == (16, 3)
    np.testing.assert_allclose(np.asarray(outs), np.asarray(refs),
                               rtol=1e-4, atol=1e-4)

    print("KERNEL_OK")
</pallas_src>

<mosaic_0001>
module attributes {stable_mosaic.version = 11 : i64} {
  func.func @_mlp_kernel(%arg0: i32, %arg1: memref<8x27xf32, #tpu.memory_space<vmem>>, %arg2: memref<536x256xf32, #tpu.memory_space<vmem>>, %arg3: memref<8x128xf32, #tpu.memory_space<vmem>>) attributes {dimension_semantics = [#tpu.dimension_semantics<parallel>], iteration_bounds = array<i64: 1>, scalar_prefetch = 0 : i64, scratch_operands = 0 : i64, tpu.core_type = #tpu.core_type<tc>, window_params = [{transform_indices = @transform_0, window_bounds = array<i64: 8, 27>}, {pipeline_mode = #tpu.pipeline_mode<synchronous>, transform_indices = @transform_1, window_bounds = array<i64: 536, 256>}, {transform_indices = @transform_2, window_bounds = array<i64: 8, 128>}]} {
    %c0 = arith.constant 0 : index
    %c0_0 = arith.constant 0 : index
    %0 = vector.load %arg1[%c0, %c0_0] : memref<8x27xf32, #tpu.memory_space<vmem>>, vector<8x27xf32>
    %1 = vector.extract_strided_slice %0 {offsets = [0, 1], sizes = [8, 1], strides = [1, 1]} : vector<8x27xf32> to vector<8x1xf32>
    %2 = vector.extract_strided_slice %0 {offsets = [0, 2], sizes = [8, 1], strides = [1, 1]} : vector<8x27xf32> to vector<8x1xf32>
    %3 = vector.extract_strided_slice %0 {offsets = [0, 3], sizes = [8, 1], strides = [1, 1]} : vector<8x27xf32> to vector<8x1xf32>
    %4 = vector.extract_strided_slice %0 {offsets = [0, 5], sizes = [8, 1], strides = [1, 1]} : vector<8x27xf32> to vector<8x1xf32>
    %5 = vector.extract_strided_slice %0 {offsets = [0, 6], sizes = [8, 1], strides = [1, 1]} : vector<8x27xf32> to vector<8x1xf32>
    %6 = vector.extract_strided_slice %0 {offsets = [0, 7], sizes = [8, 1], strides = [1, 1]} : vector<8x27xf32> to vector<8x1xf32>
    %7 = vector.extract_strided_slice %0 {offsets = [0, 9], sizes = [8, 1], strides = [1, 1]} : vector<8x27xf32> to vector<8x1xf32>
    %8 = vector.extract_strided_slice %0 {offsets = [0, 10], sizes = [8, 1], strides = [1, 1]} : vector<8x27xf32> to vector<8x1xf32>
    %9 = vector.extract_strided_slice %0 {offsets = [0, 11], sizes = [8, 1], strides = [1, 1]} : vector<8x27xf32> to vector<8x1xf32>
    %10 = vector.extract_strided_slice %0 {offsets = [0, 15], sizes = [8, 1], strides = [1, 1]} : vector<8x27xf32> to vector<8x1xf32>
    %11 = vector.extract_strided_slice %0 {offsets = [0, 16], sizes = [8, 1], strides = [1, 1]} : vector<8x27xf32> to vector<8x1xf32>
    %12 = vector.extract_strided_slice %0 {offsets = [0, 17], sizes = [8, 1], strides = [1, 1]} : vector<8x27xf32> to vector<8x1xf32>
    %13 = arith.mulf %3, %10 : vector<8x1xf32>
    %14 = arith.mulf %4, %12 : vector<8x1xf32>
    %15 = arith.addf %13, %14 : vector<8x1xf32>
    %cst = arith.constant 5.000000e-02 : f32
    %16 = vector.broadcast %cst : f32 to vector<8x1xf32>
    %17 = arith.addf %15, %16 : vector<8x1xf32>
    %18 = arith.mulf %1, %11 : vector<8x1xf32>
    %19 = arith.mulf %2, %12 : vector<8x1xf32>
    %20 = arith.addf %18, %19 : vector<8x1xf32>
    %cst_1 = arith.constant 5.000000e-02 : f32
    %21 = vector.broadcast %cst_1 : f32 to vector<8x1xf32>
    %22 = arith.addf %20, %21 : vector<8x1xf32>
    %23 = arith.mulf %5, %10 : vector<8x1xf32>
    %24 = arith.mulf %6, %11 : vector<8x1xf32>
    %25 = arith.addf %23, %24 : vector<8x1xf32>
    %cst_2 = arith.constant 5.000000e-02 : f32
    %26 = vector.broadcast %cst_2 : f32 to vector<8x1xf32>
    %27 = arith.addf %25, %26 : vector<8x1xf32>
    %28 = arith.mulf %8, %3 : vector<8x1xf32>
    %29 = arith.divf %28, %17 : vector<8x1xf32>
    %30 = arith.mulf %9, %5 : vector<8x1xf32>
    %31 = arith.divf %30, %27 : vector<8x1xf32>
    %32 = arith.addf %29, %31 : vector<8x1xf32>
    %33 = arith.mulf %7, %1 : vector<8x1xf32>
    %34 = arith.divf %33, %22 : vector<8x1xf32>
    %35 = arith.mulf %9, %6 : vector<8x1xf32>
    %36 = arith.divf %35, %27 : vector<8x1xf32>
    %37 = arith.addf %34, %36 : vector<8x1xf32>
    %38 = arith.mulf %7, %2 : vector<8x1xf32>
    %39 = arith.divf %38, %22 : vector<8x1xf32>
    %40 = arith.mulf %8, %4 : vector<8x1xf32>
    %41 = arith.divf %40, %17 : vector<8x1xf32>
    %42 = arith.addf %39, %41 : vector<8x1xf32>
    %43 = vector.extract_strided_slice %0 {offsets = [0, 18], sizes = [8, 1], strides = [1, 1]} : vector<8x27xf32> to vector<8x1xf32>
    %44 = arith.mulf %7, %43 : vector<8x1xf32>
    %45 = vector.extract_strided_slice %0 {offsets = [0, 21], sizes = [8, 1], strides = [1, 1]} : vector<8x27xf32> to vector<8x1xf32>
    %46 = arith.mulf %8, %45 : vector<8x1xf32>
    %47 = arith.addf %44, %46 : vector<8x1xf32>
    %48 = vector.extract_strided_slice %0 {offsets = [0, 24], sizes = [8, 1], strides = [1, 1]} : vector<8x27xf32> to vector<8x1xf32>
    %49 = arith.mulf %9, %48 : vector<8x1xf32>
    %50 = arith.addf %47, %49 : vector<8x1xf32>
    %51 = vector.extract_strided_slice %0 {offsets = [0, 19], sizes = [8, 1], strides = [1, 1]} : vector<8x27xf32> to vector<8x1xf32>
    %52 = arith.mulf %7, %51 : vector<8x1xf32>
    %53 = vector.extract_strided_slice %0 {offsets = [0, 22], sizes = [8, 1], strides = [1, 1]} : vector<8x27xf32> to vector<8x1xf32>
    %54 = arith.mulf %8, %53 : vector<8x1xf32>
    %55 = arith.addf %52, %54 : vector<8x1xf32>
    %56 = vector.extract_strided_slice %0 {offsets = [0, 25], sizes = [8, 1], strides = [1, 1]} : vector<8x27xf32> to vector<8x1xf32>
    %57 = arith.mulf %9, %56 : vector<8x1xf32>
    %58 = arith.addf %55, %57 : vector<8x1xf32>
    %59 = vector.extract_strided_slice %0 {offsets = [0, 20], sizes = [8, 1], strides = [1, 1]} : vector<8x27xf32> to vector<8x1xf32>
    %60 = arith.mulf %7, %59 : vector<8x1xf32>
    %61 = vector.extract_strided_slice %0 {offsets = [0, 23], sizes = [8, 1], strides = [1, 1]} : vector<8x27xf32> to vector<8x1xf32>
    %62 = arith.mulf %8, %61 : vector<8x1xf32>
    %63 = arith.addf %60, %62 : vector<8x1xf32>
    %64 = vector.extract_strided_slice %0 {offsets = [0, 26], sizes = [8, 1], strides = [1, 1]} : vector<8x27xf32> to vector<8x1xf32>
    %65 = arith.mulf %9, %64 : vector<8x1xf32>
    %66 = arith.addf %63, %65 : vector<8x1xf32>
    %c0_3 = arith.constant 0 : index
    %c0_4 = arith.constant 0 : index
    %67 = vector.load %arg2[%c0_3, %c0_4] : memref<536x256xf32, #tpu.memory_space<vmem>>, vector<1x256xf32>
    %68 = vector.broadcast %50 : vector<8x1xf32> to vector<8x256xf32>
    %69 = vector.broadcast %67 : vector<1x256xf32> to vector<8x256xf32>
    %70 = arith.mulf %68, %69 : vector<8x256xf32>
    %c1 = arith.constant 1 : index
    %c0_5 = arith.constant 0 : index
    %71 = vector.load %arg2[%c1, %c0_5] : memref<536x256xf32, #tpu.memory_space<vmem>>, vector<1x256xf32>
    %72 = vector.broadcast %58 : vector<8x1xf32> to vector<8x256xf32>
    %73 = vector.broadcast %71 : vector<1x256xf32> to vector<8x256xf32>
    %74 = arith.mulf %72, %73 : vector<8x256xf32>
    %c2 = arith.constant 2 : index
    %c0_6 = arith.constant 0 : index
    %75 = vector.load %arg2[%c2, %c0_6] : memref<536x256xf32, #tpu.memory_space<vmem>>, vector<1x256xf32>
    %76 = vector.broadcast %66 : vector<8x1xf32> to vector<8x256xf32>
    %77 = vector.broadcast %75 : vector<1x256xf32> to vector<8x256xf32>
    %78 = arith.mulf %76, %77 : vector<8x256xf32>
    %c3 = arith.constant 3 : index
    %c0_7 = arith.constant 0 : index
    %79 = vector.load %arg2[%c3, %c0_7] : memref<536x256xf32, #tpu.memory_space<vmem>>, vector<1x256xf32>
    %80 = vector.broadcast %32 : vector<8x1xf32> to vector<8x256xf32>
    %81 = vector.broadcast %79 : vector<1x256xf32> to vector<8x256xf32>
    %82 = arith.mulf %80, %81 : vector<8x256xf32>
    %c4 = arith.constant 4 : index
    %c0_8 = arith.constant 0 : index
    %83 = vector.load %arg2[%c4, %c0_8] : memref<536x256xf32, #tpu.memory_space<vmem>>, vector<1x256xf32>
    %84 = vector.broadcast %37 : vector<8x1xf32> to vector<8x256xf32>
    %85 = vector.broadcast %83 : vector<1x256xf32> to vector<8x256xf32>
    %86 = arith.mulf %84, %85 : vector<8x256xf32>
    %c5 = arith.constant 5 : index
    %c0_9 = arith.constant 0 : index
    %87 = vector.load %arg2[%c5, %c0_9] : memref<536x256xf32, #tpu.memory_space<vmem>>, vector<1x256xf32>
    %88 = vector.broadcast %42 : vector<8x1xf32> to vector<8x256xf32>
    %89 = vector.broadcast %87 : vector<1x256xf32> to vector<8x256xf32>
    %90 = arith.mulf %88, %89 : vector<8x256xf32>
    %c6 = arith.constant 6 : index
    %c0_10 = arith.constant 0 : index
    %91 = vector.load %arg2[%c6, %c0_10] : memref<536x256xf32, #tpu.memory_space<vmem>>, vector<1x256xf32>
    %92 = vector.broadcast %10 : vector<8x1xf32> to vector<8x256xf32>
    %93 = vector.broadcast %91 : vector<1x256xf32> to vector<8x256xf32>
    %94 = arith.mulf %92, %93 : vector<8x256xf32>
    %c7 = arith.constant 7 : index
    %c0_11 = arith.constant 0 : index
    %95 = vector.load %arg2[%c7, %c0_11] : memref<536x256xf32, #tpu.memory_space<vmem>>, vector<1x256xf32>
    %96 = vector.broadcast %11 : vector<8x1xf32> to vector<8x256xf32>
    %97 = vector.broadcast %95 : vector<1x256xf32> to vector<8x256xf32>
    %98 = arith.mulf %96, %97 : vector<8x256xf32>
    %c8 = arith.constant 8 : index
    %c0_12 = arith.constant 0 : index
    %99 = vector.load %arg2[%c8, %c0_12] : memref<536x256xf32, #tpu.memory_space<vmem>>, vector<1x256xf32>
    %100 = vector.broadcast %12 : vector<8x1xf32> to vector<8x256xf32>
    %101 = vector.broadcast %99 : vector<1x256xf32> to vector<8x256xf32>
    %102 = arith.mulf %100, %101 : vector<8x256xf32>
    %103 = arith.addf %70, %74 : vector<8x256xf32>
    %104 = arith.addf %78, %82 : vector<8x256xf32>
    %105 = arith.addf %103, %104 : vector<8x256xf32>
    %106 = arith.addf %86, %90 : vector<8x256xf32>
    %107 = arith.addf %94, %98 : vector<8x256xf32>
    %108 = arith.addf %106, %107 : vector<8x256xf32>
    %109 = arith.addf %105, %108 : vector<8x256xf32>
    %110 = arith.addf %109, %102 : vector<8x256xf32>
    %c528 = arith.constant 528 : index
    %c0_13 = arith.constant 0 : index
    %111 = vector.load %arg2[%c528, %c0_13] : memref<536x256xf32, #tpu.memory_space<vmem>>, vector<1x256xf32>
    %112 = vector.broadcast %111 : vector<1x256xf32> to vector<8x256xf32>
    %113 = arith.addf %110, %112 : vector<8x256xf32>
    %cst_14 = arith.constant 0.000000e+00 : f32
    %114 = vector.broadcast %cst_14 : f32 to vector<8x256xf32>
    %115 = arith.maximumf %113, %114 : vector<8x256xf32>
    %c16 = arith.constant 16 : index
    %c0_15 = arith.constant 0 : index
    %116 = vector.load %arg2[%c16, %c0_15] : memref<536x256xf32, #tpu.memory_space<vmem>>, vector<256x256xf32>
    %cst_16 = arith.constant dense<0.000000e+00> : vector<8x256xf32>
    %117 = tpu.matmul %115, %116, %cst_16 {dimension_numbers = #tpu.dot_dimension_numbers<[1], [0], [0], [1], [0, 0, 1, 1], [], []>} : vector<8x256xf32>, vector<256x256xf32>, vector<8x256xf32> -> vector<8x256xf32>
    %c529 = arith.constant 529 : index
    %c0_17 = arith.constant 0 : index
    %118 = vector.load %arg2[%c529, %c0_17] : memref<536x256xf32, #tpu.memory_space<vmem>>, vector<1x256xf32>
    %119 = vector.broadcast %118 : vector<1x256xf32> to vector<8x256xf32>
    %120 = arith.addf %117, %119 : vector<8x256xf32>
    %cst_18 = arith.constant 0.000000e+00 : f32
    %121 = vector.broadcast %cst_18 : f32 to vector<8x256xf32>
    %122 = arith.maximumf %120, %121 : vector<8x256xf32>
    %c272 = arith.constant 272 : index
    %c0_19 = arith.constant 0 : index
    %123 = vector.load %arg2[%c272, %c0_19] : memref<536x256xf32, #tpu.memory_space<vmem>>, vector<256x128xf32>
    %cst_20 = arith.constant dense<0.000000e+00> : vector<8x128xf32>
    %124 = tpu.matmul %122, %123, %cst_20 {dimension_numbers = #tpu.dot_dimension_numbers<[1], [0], [0], [1], [0, 0, 1, 1], [], []>} : vector<8x256xf32>, vector<256x128xf32>, vector<8x128xf32> -> vector<8x128xf32>
    %c530 = arith.constant 530 : index
    %c0_21 = arith.constant 0 : index
    %125 = vector.load %arg2[%c530, %c0_21] : memref<536x256xf32, #tpu.memory_space<vmem>>, vector<1x128xf32>
    %126 = vector.broadcast %125 : vector<1x128xf32> to vector<8x128xf32>
    %127 = arith.addf %124, %126 : vector<8x128xf32>
    %cst_22 = arith.constant 0.000000e+00 : f32
    %128 = vector.broadcast %cst_22 : f32 to vector<8x128xf32>
    %129 = arith.maximumf %127, %128 : vector<8x128xf32>
    %c272_23 = arith.constant 272 : index
    %c128 = arith.constant 128 : index
    %130 = vector.load %arg2[%c272_23, %c128] : memref<536x256xf32, #tpu.memory_space<vmem>>, vector<128x128xf32>
    %cst_24 = arith.constant dense<0.000000e+00> : vector<8x128xf32>
    %131 = tpu.matmul %129, %130, %cst_24 {dimension_numbers = #tpu.dot_dimension_numbers<[1], [0], [0], [1], [0, 0, 1, 1], [], []>} : vector<8x128xf32>, vector<128x128xf32>, vector<8x128xf32> -> vector<8x128xf32>
    %c531 = arith.constant 531 : index
    %c0_25 = arith.constant 0 : index
    %132 = vector.load %arg2[%c531, %c0_25] : memref<536x256xf32, #tpu.memory_space<vmem>>, vector<1x128xf32>
    %133 = vector.broadcast %132 : vector<1x128xf32> to vector<8x128xf32>
    %134 = arith.addf %131, %133 : vector<8x128xf32>
    %c0_26 = arith.constant 0 : index
    %c0_27 = arith.constant 0 : index
    %135 = vector.load %arg3[%c0_26, %c0_27] : memref<8x128xf32, #tpu.memory_space<vmem>>, vector<8x128xf32>
    tpu.vector_store %arg3[%c0_26, %c0_27], %134 {strides = array<i32>} : memref<8x128xf32, #tpu.memory_space<vmem>>, vector<8x128xf32>,
    return
  }
  func.func @transform_0(%arg0: i32) -> (i32, i32) {
    %c0_i32 = arith.constant 0 : i32
    %c0_i32_0 = arith.constant 0 : i32
    return %arg0, %c0_i32 : i32, i32
  }
  func.func @transform_1(%arg0: i32) -> (i32, i32) {
    %c0_i32 = arith.constant 0 : i32
    %c0_i32_0 = arith.constant 0 : i32
    %c0_i32_1 = arith.constant 0 : i32
    return %c0_i32, %c0_i32_0 : i32, i32
  }
  func.func @transform_2(%arg0: i32) -> (i32, i32) {
    %c0_i32 = arith.constant 0 : i32
    %c0_i32_0 = arith.constant 0 : i32
    return %arg0, %c0_i32 : i32, i32
  }
}

</mosaic_0001>

<llo_original>
// kernel: forward.1
$region0: #{forward.1}
  #allocation0 [shape = 'u32[]', space=smem, size = 0x4, offset = 0x4, fixed_abs, tag = 'smem constant byte address 0x4 - core index']
  #allocation1 [shape = 'u32[144,128]{1,0:T(1,128)}', space=vmem, size = 0x12000, scoped, tag = 'internal scratch']
  %s0 = inlined_call_operand.vmem [shape: f32[8,27], index: 0, kind: input, shape index: {}]
  %s1 = inlined_call_operand.hbm [shape: f32[536,256], index: 1, kind: input, shape index: {}]
  %s2 = inlined_call_operand.vmem [shape: f32[8,128], index: 2, kind: output, shape index: {}]
  %s3 = sld [smem:[#allocation0]]
  $region22: #{forward.1} parent=0
    _
  %s5 = ssub.s32 1, %s3
  %s6 = scalar_select 0, %s5, %s3
  $region1: #{forward.1} parent=0
    #allocation2 [shape = 'u8[548864]{0}', space=vmem, size = 0x86000, scoped, tag = 'input window, operand 1, single buffered']
    #allocation3 [shape = 's32[1]{0}', space=sflag, size = 0x4, scoped, tag = 'scoped memory for forward.1']
    %7 = vsyncpa [#allocation3], 0
    // Predicated region
    $region2: #{forward.1} parent=1 // pred_check
      _
    $region3: #{forward.1} parent=1 // pred_check_branch
      %9 = sbr.rel (0) target = $region5
    $region4: #{forward.1} parent=1 // pred_region
      _
    $region5: #{forward.1} parent=1 // pred_fallthru
      _
    // Predicated region
    $region6: #{forward.1} parent=1 // pred_check
      _
    $region7: #{forward.1} parent=1 // pred_check_branch
      %11 = sbr.rel (0) target = $region9
    $region8: #{forward.1} parent=1 // pred_region
      %s13 = ssub.s32 17152, 17152
      %14 = vsyncadd [#allocation3], %s13
      %s15 = sshll.u32 [#allocation2], 4
      %s16 = int_to_ptr.vmem [resolvable:$true] %s15
      %21 = dma.hbm_to_vmem [thread:$0]  %s1, 17152, %s16, [#allocation3], 256, 256, 16
    $region9: #{forward.1} parent=1 // pred_fallthru
      _
    // Predicated region
    $region10: #{forward.1} parent=1 // pred_check
      _
    $region11: #{forward.1} parent=1 // pred_check_branch
      %23 = sbr.rel (0) target = $region13
    $region12: #{forward.1} parent=1 // pred_region
      %24 = dma.done [#allocation3], 17152
    $region13: #{forward.1} parent=1 // pred_fallthru
      _
    %v25 = vld [vmem:[%s0] sm:$0xff]
    %27 = vrot.lane.b32.xlu0 %v25, 116
    %v28 = vpop.permute.xlu0 %27
    %v30 = vmul.f32 %v25, %v28
    %32 = vrot.lane.b32.xlu0 %v30, 126
    %v33 = vpop.permute.xlu0 %32
    %v35 = vadd.f32 %v30, %v33
    %v36 = vadd.f32 %v35, 0.05
    %37 = vrot.lane.b32.xlu0 %v25, 113
    %v38 = vpop.permute.xlu0 %37
    %v40 = vmul.f32 %v25, %v38
    %42 = vrot.lane.b32.xlu0 %v40, 127
    %v43 = vpop.permute.xlu0 %42
    %v45 = vadd.f32 %v40, %v43
    %v46 = vadd.f32 %v45, 0.05
    %47 = vrot.lane.b32.xlu0 %v25, 119
    %v48 = vpop.permute.xlu0 %47
    %v50 = vmul.f32 %v25, %v48
    %52 = vrot.lane.b32.xlu0 %v50, 127
    %v53 = vpop.permute.xlu0 %52
    %v55 = vadd.f32 %v50, %v53
    %v56 = vadd.f32 %v55, 0.05
    %57 = vrot.lane.b32.xlu0 %v25, 7
    %v58 = vpop.permute.xlu0 %57
    %v60 = vmul.f32 %v25, %v58
    %62 = vrot.lane.b32.xlu0 %v36, 7
    %v63 = vpop.permute.xlu0 %62
    %v65 = vrcp.pop %v63
    %v66 = vmul.f32 %v60, %v65
    %67 = vrot.lane.b32.xlu0 %v25, 5
    %v68 = vpop.permute.xlu0 %67
    %v70 = vmul.f32 %v25, %v68
    %72 = vrot.lane.b32.xlu0 %v56, 5
    %v73 = vpop.permute.xlu0 %72
    %v75 = vrcp.pop %v73
    %v76 = vmul.f32 %v70, %v75
    %78 = vrot.lane.b32.xlu0 %v76, 127
    %v79 = vpop.permute.xlu0 %78
    %v81 = vadd.f32 %v66, %v79
    %82 = vrot.lane.b32.xlu0 %v25, 8
    %v83 = vpop.permute.xlu0 %82
    %v85 = vmul.f32 %v25, %v83
    %87 = vrot.lane.b32.xlu0 %v46, 8
    %v88 = vpop.permute.xlu0 %87
    %v90 = vrcp.pop %v88
    %v91 = vmul.f32 %v85, %v90
    %92 = vrot.lane.b32.xlu0 %v25, 4
    %v93 = vpop.permute.xlu0 %92
    %v95 = vmul.f32 %v25, %v93
    %v96 = vmul.f32 %v95, %v75
    %98 = vrot.lane.b32.xlu0 %v96, 126
    %v99 = vpop.permute.xlu0 %98
    %v101 = vadd.f32 %v91, %v99
    %v102 = vmul.f32 %v60, %v90
    %v103 = vmul.f32 %v70, %v65
    %105 = vrot.lane.b32.xlu0 %v103, 127
    %v106 = vpop.permute.xlu0 %105
    %v108 = vadd.f32 %v102, %v106
    %109 = vrot.lane.b32.xlu0 %v25, 117
    %v110 = vpop.permute.xlu0 %109
    %v112 = vmul.f32 %v25, %v110
    %114 = vrot.lane.b32.xlu0 %v112, 127
    %v115 = vpop.permute.xlu0 %114
    %v117 = vadd.f32 %v50, %v115
    %118 = vrot.lane.b32.xlu0 %v25, 115
    %v119 = vpop.permute.xlu0 %118
    %v121 = vmul.f32 %v25, %v119
    %123 = vrot.lane.b32.xlu0 %v121, 126
    %v124 = vpop.permute.xlu0 %123
    %v126 = vadd.f32 %v117, %v124
    %127 = vrot.lane.b32.xlu0 %v25, 118
    %v128 = vpop.permute.xlu0 %127
    %v130 = vmul.f32 %v25, %v128
    %131 = vrot.lane.b32.xlu0 %v30, 127
    %v132 = vpop.permute.xlu0 %131
    %v134 = vadd.f32 %v130, %v132
    %135 = vrot.lane.b32.xlu0 %v25, 114
    %v136 = vpop.permute.xlu0 %135
    %v138 = vmul.f32 %v25, %v136
    %140 = vrot.lane.b32.xlu0 %v138, 126
    %v141 = vpop.permute.xlu0 %140
    %v143 = vadd.f32 %v134, %v141
    %144 = vrot.lane.b32.xlu0 %v121, 127
    %v145 = vpop.permute.xlu0 %144
    %v147 = vadd.f32 %v112, %v145
    %148 = vrot.lane.b32.xlu0 %v40, 126
    %v149 = vpop.permute.xlu0 %148
    %v151 = vadd.f32 %v147, %v149
    %v152 = vld [vmem:[#allocation2] ss:$8 sm:$0x3]
    %154 = vset.pattern.permute.xlu0 9
    %155 = vperm.xlu0 %154, %v126
    %v156 = vpop.permute.xlu0 %155
    %v159 = vlaneseq
    %v160 = vshrl.u32 %v159, 7
    %v161 = vsub.s32 0, %v160
    %v162 = vrot.slane %v152, %v161
    %v163 = vlaneseq
    %v164 = vshrl.u32 %v163, 7
    %v165 = vsub.s32 1, %v164
    %v166 = vrot.slane %v152, %v165
    %v169 = vmul.f32 %v156, %v162
    %v170 = vmul.f32 %v156, %v166
    %s171 = scalar_lea.vmem [#allocation2], 1
    %v172 = vld [vmem:[%s171] ss:$8 sm:$0x3]
    %174 = vset.pattern.permute.xlu0 9
    %175 = vperm.xlu0 %174, %v143
    %v176 = vpop.permute.xlu0 %175
    %v179 = vlaneseq
    %v180 = vshrl.u32 %v179, 7
    %v181 = vsub.s32 0, %v180
    %v182 = vrot.slane %v172, %v181
    %v183 = vlaneseq
    %v184 = vshrl.u32 %v183, 7
    %v185 = vsub.s32 1, %v184
    %v186 = vrot.slane %v172, %v185
    %v189 = vmul.f32 %v176, %v182
    %v190 = vmul.f32 %v176, %v186
    %s191 = scalar_lea.vmem [#allocation2], 2
    %v192 = vld [vmem:[%s191] ss:$8 sm:$0x3]
    %194 = vset.pattern.permute.xlu0 9
    %195 = vperm.xlu0 %194, %v151
    %v196 = vpop.permute.xlu0 %195
    %v199 = vlaneseq
    %v200 = vshrl.u32 %v199, 7
    %v201 = vsub.s32 0, %v200
    %v202 = vrot.slane %v192, %v201
    %v203 = vlaneseq
    %v204 = vshrl.u32 %v203, 7
    %v205 = vsub.s32 1, %v204
    %v206 = vrot.slane %v192, %v205
    %v209 = vmul.f32 %v196, %v202
    %v210 = vmul.f32 %v196, %v206
    %s211 = scalar_lea.vmem [#allocation2], 3
    %v212 = vld [vmem:[%s211] ss:$8 sm:$0x3]
    %214 = vset.pattern.permute.xlu0 10
    %215 = vperm.xlu0 %214, %v81
    %v216 = vpop.permute.xlu0 %215
    %v219 = vlaneseq
    %v220 = vshrl.u32 %v219, 7
    %v221 = vsub.s32 0, %v220
    %v222 = vrot.slane %v212, %v221
    %v223 = vlaneseq
    %v224 = vshrl.u32 %v223, 7
    %v225 = vsub.s32 1, %v224
    %v226 = vrot.slane %v212, %v225
    %v229 = vmul.f32 %v216, %v222
    %v230 = vmul.f32 %v216, %v226
    %s231 = scalar_lea.vmem [#allocation2], 4
    %v232 = vld [vmem:[%s231] ss:$8 sm:$0x3]
    %234 = vset.pattern.permute.xlu0 9
    %235 = vperm.xlu0 %234, %v101
    %v236 = vpop.permute.xlu0 %235
    %v239 = vlaneseq
    %v240 = vshrl.u32 %v239, 7
    %v241 = vsub.s32 0, %v240
    %v242 = vrot.slane %v232, %v241
    %v243 = vlaneseq
    %v244 = vshrl.u32 %v243, 7
    %v245 = vsub.s32 1, %v244
    %v246 = vrot.slane %v232, %v245
    %v249 = vmul.f32 %v236, %v242
    %v250 = vmul.f32 %v236, %v246
    %s251 = scalar_lea.vmem [#allocation2], 5
    %v252 = vld [vmem:[%s251] ss:$8 sm:$0x3]
    %254 = vset.pattern.permute.xlu0 9
    %255 = vperm.xlu0 %254, %v108
    %v256 = vpop.permute.xlu0 %255
    %v259 = vlaneseq
    %v260 = vshrl.u32 %v259, 7
    %v261 = vsub.s32 0, %v260
    %v262 = vrot.slane %v252, %v261
    %v263 = vlaneseq
    %v264 = vshrl.u32 %v263, 7
    %v265 = vsub.s32 1, %v264
    %v266 = vrot.slane %v252, %v265
    %v269 = vmul.f32 %v256, %v262
    %v270 = vmul.f32 %v256, %v266
    %s271 = scalar_lea.vmem [#allocation2], 6
    %v272 = vld [vmem:[%s271] ss:$8 sm:$0x3]
    %273 = vset.pattern.permute.xlu0 15
    %274 = vperm.xlu0 %273, %v25
    %v275 = vpop.permute.xlu0 %274
    %v278 = vlaneseq
    %v279 = vshrl.u32 %v278, 7
    %v280 = vsub.s32 0, %v279
    %v281 = vrot.slane %v272, %v280
    %v282 = vlaneseq
    %v283 = vshrl.u32 %v282, 7
    %v284 = vsub.s32 1, %v283
    %v285 = vrot.slane %v272, %v284
    %v288 = vmul.f32 %v275, %v281
    %v289 = vmul.f32 %v275, %v285
    %s290 = scalar_lea.vmem [#allocation2], 7
    %v291 = vld [vmem:[%s290] ss:$8 sm:$0x3]
    %292 = vset.pattern.permute.xlu0 16
    %293 = vperm.xlu0 %292, %v25
    %v294 = vpop.permute.xlu0 %293
    %v297 = vlaneseq
    %v298 = vshrl.u32 %v297, 7
    %v299 = vsub.s32 0, %v298
    %v300 = vrot.slane %v291, %v299
    %v301 = vlaneseq
    %v302 = vshrl.u32 %v301, 7
    %v303 = vsub.s32 1, %v302
    %v304 = vrot.slane %v291, %v303
    %v307 = vmul.f32 %v294, %v300
    %v308 = vmul.f32 %v294, %v304
    %s309 = scalar_lea.vmem [#allocation2], 16
    %v310 = vld [vmem:[%s309] ss:$8 sm:$0x3]
    %311 = vset.pattern.permute.xlu0 17
    %312 = vperm.xlu0 %311, %v25
    %v313 = vpop.permute.xlu0 %312
    %v316 = vlaneseq
    %v317 = vshrl.u32 %v316, 7
    %v318 = vsub.s32 0, %v317
    %v319 = vrot.slane %v310, %v318
    %v320 = vlaneseq
    %v321 = vshrl.u32 %v320, 7
    %v322 = vsub.s32 1, %v321
    %v323 = vrot.slane %v310, %v322
    %v326 = vmul.f32 %v313, %v319
    %v327 = vmul.f32 %v313, %v323
    %v328 = vadd.f32 %v169, %v189
    %v329 = vadd.f32 %v170, %v190
    %v330 = vadd.f32 %v209, %v229
    %v331 = vadd.f32 %v210, %v230
    %v332 = vadd.f32 %v328, %v330
    %v333 = vadd.f32 %v329, %v331
    %v334 = vadd.f32 %v249, %v269
    %v335 = vadd.f32 %v250, %v270
    %v336 = vadd.f32 %v288, %v307
    %v337 = vadd.f32 %v289, %v308
    %v338 = vadd.f32 %v334, %v336
    %v339 = vadd.f32 %v335, %v337
    %v340 = vadd.f32 %v332, %v338
    %v341 = vadd.f32 %v333, %v339
    %v342 = vadd.f32 %v340, %v326
    %v343 = vadd.f32 %v341, %v327
    %s344 = scalar_lea.vmem [#allocation2], 1056
    %v345 = vld [vmem:[%s344] ss:$8 sm:$0x3]
    %v347 = vlaneseq
    %v348 = vshrl.u32 %v347, 7
    %v349 = vsub.s32 0, %v348
    %v350 = vrot.slane %v345, %v349
    %v351 = vlaneseq
    %v352 = vshrl.u32 %v351, 7
    %v353 = vsub.s32 1, %v352
    %v354 = vrot.slane %v345, %v353
    %v357 = vadd.f32 %v342, %v350
    %v358 = vadd.f32 %v343, %v354
    %v359 = vmax.f32 %v357, 0.0
    %v360 = vmax.f32 %v358, 0.0
    %v361 = vld [vmem:[#allocation2 + $0x20] sm:$0xff]
    %v362 = vld [vmem:[#allocation2 + $0x28] sm:$0xff]
    %v363 = vld [vmem:[#allocation2 + $0x30] sm:$0xff]
    %v364 = vld [vmem:[#allocation2 + $0x38] sm:$0xff]
    %v365 = vld [vmem:[#allocation2 + $0x40] sm:$0xff]
    %v366 = vld [vmem:[#allocation2 + $0x48] sm:$0xff]
    %v367 = vld [vmem:[#allocation2 + $0x50] sm:$0xff]
    %v368 = vld [vmem:[#allocation2 + $0x58] sm:$0xff]
    %v369 = vld [vmem:[#allocation2 + $0x60] sm:$0xff]
    %v370 = vld [vmem:[#allocation2 + $0x68] sm:$0xff]
    %v371 = vld [vmem:[#allocation2 + $0x70] sm:$0xff]
    %v372 = vld [vmem:[#allocation2 + $0x78] sm:$0xff]
    %v373 = vld [vmem:[#allocation2 + $0x80] sm:$0xff]
    %v374 = vld [vmem:[#allocation2 + $0x88] sm:$0xff]
    %v375 = vld [vmem:[#allocation2 + $0x90] sm:$0xff]
    %v376 = vld [vmem:[#allocation2 + $0x98] sm:$0xff]
    %v377 = vld [vmem:[#allocation2 + $0xa0] sm:$0xff]
    %v378 = vld [vmem:[#allocation2 + $0xa8] sm:$0xff]
    %v379 = vld [vmem:[#allocation2 + $0xb0] sm:$0xff]
    %v380 = vld [vmem:[#allocation2 + $0xb8] sm:$0xff]
    %v381 = vld [vmem:[#allocation2 + $0xc0] sm:$0xff]
    %v382 = vld [vmem:[#allocation2 + $0xc8] sm:$0xff]
    %v383 = vld [vmem:[#allocation2 + $0xd0] sm:$0xff]
    %v384 = vld [vmem:[#allocation2 + $0xd8] sm:$0xff]
    %v385 = vld [vmem:[#allocation2 + $0xe0] sm:$0xff]
    %v386 = vld [vmem:[#allocation2 + $0xe8] sm:$0xff]
    %v387 = vld [vmem:[#allocation2 + $0xf0] sm:$0xff]
    %v388 = vld [vmem:[#allocation2 + $0xf8] sm:$0xff]
    %v389 = vld [vmem:[#allocation2 + $0x100] sm:$0xff]
    %v390 = vld [vmem:[#allocation2 + $0x108] sm:$0xff]
    %v391 = vld [vmem:[#allocation2 + $0x110] sm:$0xff]
    %v392 = vld [vmem:[#allocation2 + $0x118] sm:$0xff]
    %v393 = vld [vmem:[#allocation2 + $0x120] sm:$0xff]
    %v394 = vld [vmem:[#allocation2 + $0x128] sm:$0xff]
    %v395 = vld [vmem:[#allocation2 + $0x130] sm:$0xff]
    %v396 = vld [vmem:[#allocation2 + $0x138] sm:$0xff]
    %v397 = vld [vmem:[#allocation2 + $0x140] sm:$0xff]
    %v398 = vld [vmem:[#allocation2 + $0x148] sm:$0xff]
    %v399 = vld [vmem:[#allocation2 + $0x150] sm:$0xff]
    %v400 = vld [vmem:[#allocation2 + $0x158] sm:$0xff]
    %v401 = vld [vmem:[#allocation2 + $0x160] sm:$0xff]
    %v402 = vld [vmem:[#allocation2 + $0x168] sm:$0xff]
    %v403 = vld [vmem:[#allocation2 + $0x170] sm:$0xff]
    %v404 = vld [vmem:[#allocation2 + $0x178] sm:$0xff]
    %v405 = vld [vmem:[#allocation2 + $0x180] sm:$0xff]
    %v406 = vld [vmem:[#allocation2 + $0x188] sm:$0xff]
    %v407 = vld [vmem:[#allocation2 + $0x190] sm:$0xff]
    %v408 = vld [vmem:[#allocation2 + $0x198] sm:$0xff]
    %v409 = vld [vmem:[#allocation2 + $0x1a0] sm:$0xff]
    %v410 = vld [vmem:[#allocation2 + $0x1a8] sm:$0xff]
    %v411 = vld [vmem:[#allocation2 + $0x1b0] sm:$0xff]
    %v412 = vld [vmem:[#allocation2 + $0x1b8] sm:$0xff]
    %v413 = vld [vmem:[#allocation2 + $0x1c0] sm:$0xff]
    %v414 = vld [vmem:[#allocation2 + $0x1c8] sm:$0xff]
    %v415 = vld [vmem:[#allocation2 + $0x1d0] sm:$0xff]
    %v416 = vld [vmem:[#allocation2 + $0x1d8] sm:$0xff]
    %v417 = vld [vmem:[#allocation2 + $0x1e0] sm:$0xff]
    %v418 = vld [vmem:[#allocation2 + $0x1e8] sm:$0xff]
    %v419 = vld [vmem:[#allocation2 + $0x1f0] sm:$0xff]
    %v420 = vld [vmem:[#allocation2 + $0x1f8] sm:$0xff]
    %v421 = vld [vmem:[#allocation2 + $0x200] sm:$0xff]
    %v422 = vld [vmem:[#allocation2 + $0x208] sm:$0xff]
    %v423 = vld [vmem:[#allocation2 + $0x210] sm:$0xff]
    %v424 = vld [vmem:[#allocation2 + $0x218] sm:$0xff]
    %s425 = scalar_lea.vmem [#allocation2], 1057
    %v426 = vld [vmem:[%s425] ss:$8 sm:$0x3]
    %v428 = vlaneseq
    %v429 = vshrl.u32 %v428, 7
    %v430 = vsub.s32 0, %v429
    %v431 = vrot.slane %v426, %v430
    %v432 = vlaneseq
    %v433 = vshrl.u32 %v432, 7
    %v434 = vsub.s32 1, %v433
    %v435 = vrot.slane %v426, %v434
    %438 = vmatprep.subr.mxu0 %v362
    %439 = vmatpush1.msra.mxu0 %v361
    %440 = vmatprep.subr.mxu0 %v364
    %441 = vmatpush1.msra.mxu0 %v363
    %442 = vmatprep.subr.mxu0 %v366
    %443 = vmatpush1.msra.mxu0 %v365
    %444 = vmatprep.subr.mxu0 %v368
    %445 = vmatpush1.msra.mxu0 %v367
    %446 = vmatprep.subr.mxu0 %v370
    %447 = vmatpush1.msra.mxu0 %v369
    %448 = vmatprep.subr.mxu0 %v372
    %449 = vmatpush1.msra.mxu0 %v371
    %450 = vmatprep.subr.mxu0 %v374
    %451 = vmatpush1.msra.mxu0 %v373
    %452 = vmatprep.subr.mxu0 %v376
    %453 = vmatpush1.msra.mxu0 %v375
    %454 = vmatprep.subr.mxu0 %v378
    %455 = vmatpush1.msra.mxu0 %v377
    %456 = vmatprep.subr.mxu0 %v380
    %457 = vmatpush1.msra.mxu0 %v379
    %458 = vmatprep.subr.mxu0 %v382
    %459 = vmatpush1.msra.mxu0 %v381
    %460 = vmatprep.subr.mxu0 %v384
    %461 = vmatpush1.msra.mxu0 %v383
    %462 = vmatprep.subr.mxu0 %v386
    %463 = vmatpush1.msra.mxu0 %v385
    %464 = vmatprep.subr.mxu0 %v388
    %465 = vmatpush1.msra.mxu0 %v387
    %466 = vmatprep.subr.mxu0 %v390
    %467 = vmatpush1.msra.mxu0 %v389
    %468 = vmatprep.subr.mxu0 %v392
    %469 = vmatpush1.msra.mxu0 %v391
    %470 = vmatprep.subr.mxu0 %v394
    %471 = vmatpush1.msra.mxu0 %v393
    %472 = vmatprep.subr.mxu0 %v396
    %473 = vmatpush1.msra.mxu0 %v395
    %474 = vmatprep.subr.mxu0 %v398
    %475 = vmatpush1.msra.mxu0 %v397
    %476 = vmatprep.subr.mxu0 %v400
    %477 = vmatpush1.msra.mxu0 %v399
    %478 = vmatprep.subr.mxu0 %v402
    %479 = vmatpush1.msra.mxu0 %v401
    %480 = vmatprep.subr.mxu0 %v404
    %481 = vmatpush1.msra.mxu0 %v403
    %482 = vmatprep.subr.mxu0 %v406
    %483 = vmatpush1.msra.mxu0 %v405
    %484 = vmatprep.subr.mxu0 %v408
    %485 = vmatpush1.msra.mxu0 %v407
    %486 = vmatprep.subr.mxu0 %v410
    %487 = vmatpush1.msra.mxu0 %v409
    %488 = vmatprep.subr.mxu0 %v412
    %489 = vmatpush1.msra.mxu0 %v411
    %490 = vmatprep.subr.mxu0 %v414
    %491 = vmatpush1.msra.mxu0 %v413
    %492 = vmatprep.subr.mxu0 %v416
    %493 = vmatpush1.msra.mxu0 %v415
    %494 = vmatprep.subr.mxu0 %v418
    %495 = vmatpush1.msra.mxu0 %v417
    %496 = vmatprep.subr.mxu0 %v420
    %497 = vmatpush1.msra.mxu0 %v419
    %498 = vmatprep.subr.mxu0 %v422
    %499 = vmatpush1.msra.mxu0 %v421
    %500 = vmatprep.subr.mxu0 %v424
    %501 = vmatpush1.msra.mxu0 %v423
    %502 = vmatprep.mubr.f32.mxu0 %v360
    %503 = vmatmul.mubr.f32.gmra.mrb[0].mxu0 %v359
    %v504 = vpop.f32.mrb[0].mxu0
    %v505 = vadd.f32 %v431, %v504
    %v506 = vpop.f32.mrb[0].mxu0
    %v507 = vadd.f32 %v435, %v506
    %508 = vdwg.mxu0
    %v509 = vmax.f32 %v505, 0.0
    %v510 = vmax.f32 %v507, 0.0
    %v511 = vld [vmem:[#allocation2 + $0x220] sm:$0xff]
    %v512 = vld [vmem:[#allocation2 + $0x230] sm:$0xff]
    %v513 = vld [vmem:[#allocation2 + $0x240] sm:$0xff]
    %v514 = vld [vmem:[#allocation2 + $0x250] sm:$0xff]
    %v515 = vld [vmem:[#allocation2 + $0x260] sm:$0xff]
    %v516 = vld [vmem:[#allocation2 + $0x270] sm:$0xff]
    %v517 = vld [vmem:[#allocation2 + $0x280] sm:$0xff]
    %v518 = vld [vmem:[#allocation2 + $0x290] sm:$0xff]
    %v519 = vld [vmem:[#allocation2 + $0x2a0] sm:$0xff]
    %v520 = vld [vmem:[#allocation2 + $0x2b0] sm:$0xff]
    %v521 = vld [vmem:[#allocation2 + $0x2c0] sm:$0xff]
    %v522 = vld [vmem:[#allocation2 + $0x2d0] sm:$0xff]
    %v523 = vld [vmem:[#allocation2 + $0x2e0] sm:$0xff]
    %v524 = vld [vmem:[#allocation2 + $0x2f0] sm:$0xff]
    %v525 = vld [vmem:[#allocation2 + $0x300] sm:$0xff]
    %v526 = vld [vmem:[#allocation2 + $0x310] sm:$0xff]
    %v527 = vld [vmem:[#allocation2 + $0x320] sm:$0xff]
    %v528 = vld [vmem:[#allocation2 + $0x330] sm:$0xff]
    %v529 = vld [vmem:[#allocation2 + $0x340] sm:$0xff]
    %v530 = vld [vmem:[#allocation2 + $0x350] sm:$0xff]
    %v531 = vld [vmem:[#allocation2 + $0x360] sm:$0xff]
    %v532 = vld [vmem:[#allocation2 + $0x370] sm:$0xff]
    %v533 = vld [vmem:[#allocation2 + $0x380] sm:$0xff]
    %v534 = vld [vmem:[#allocation2 + $0x390] sm:$0xff]
    %v535 = vld [vmem:[#allocation2 + $0x3a0] sm:$0xff]
    %v536 = vld [vmem:[#allocation2 + $0x3b0] sm:$0xff]
    %v537 = vld [vmem:[#allocation2 + $0x3c0] sm:$0xff]
    %v538 = vld [vmem:[#allocation2 + $0x3d0] sm:$0xff]
    %v539 = vld [vmem:[#allocation2 + $0x3e0] sm:$0xff]
    %v540 = vld [vmem:[#allocation2 + $0x3f0] sm:$0xff]
    %v541 = vld [vmem:[#allocation2 + $0x400] sm:$0xff]
    %v542 = vld [vmem:[#allocation2 + $0x410] sm:$0xff]
    %v543 = vld [vmem:[#allocation2 + $0x422] ss:$0 sm:$0xff]
    %544 = vmatprep.subr.mxu0 0.0
    %545 = vmatpush1.msra.mxu0 %v511
    %546 = vmatprep.subr.mxu0 0.0
    %547 = vmatpush1.msra.mxu0 %v512
    %548 = vmatprep.subr.mxu0 0.0
    %549 = vmatpush1.msra.mxu0 %v513
    %550 = vmatprep.subr.mxu0 0.0
    %551 = vmatpush1.msra.mxu0 %v514
    %552 = vmatprep.subr.mxu0 0.0
    %553 = vmatpush1.msra.mxu0 %v515
    %554 = vmatprep.subr.mxu0 0.0
    %555 = vmatpush1.msra.mxu0 %v516
    %556 = vmatprep.subr.mxu0 0.0
    %557 = vmatpush1.msra.mxu0 %v517
    %558 = vmatprep.subr.mxu0 0.0
    %559 = vmatpush1.msra.mxu0 %v518
    %560 = vmatprep.subr.mxu0 0.0
    %561 = vmatpush1.msra.mxu0 %v519
    %562 = vmatprep.subr.mxu0 0.0
    %563 = vmatpush1.msra.mxu0 %v520
    %564 = vmatprep.subr.mxu0 0.0
    %565 = vmatpush1.msra.mxu0 %v521
    %566 = vmatprep.subr.mxu0 0.0
    %567 = vmatpush1.msra.mxu0 %v522
    %568 = vmatprep.subr.mxu0 0.0
    %569 = vmatpush1.msra.mxu0 %v523
    %570 = vmatprep.subr.mxu0 0.0
    %571 = vmatpush1.msra.mxu0 %v524
    %572 = vmatprep.subr.mxu0 0.0
    %573 = vmatpush1.msra.mxu0 %v525
    %574 = vmatprep.subr.mxu0 0.0
    %575 = vmatpush1.msra.mxu0 %v526
    %576 = vmatprep.subr.mxu0 0.0
    %577 = vmatpush1.msra.mxu0 %v527
    %578 = vmatprep.subr.mxu0 0.0
    %579 = vmatpush1.msra.mxu0 %v528
    %580 = vmatprep.subr.mxu0 0.0
    %581 = vmatpush1.msra.mxu0 %v529
    %582 = vmatprep.subr.mxu0 0.0
    %583 = vmatpush1.msra.mxu0 %v530
    %584 = vmatprep.subr.mxu0 0.0
    %585 = vmatpush1.msra.mxu0 %v531
    %586 = vmatprep.subr.mxu0 0.0
    %587 = vmatpush1.msra.mxu0 %v532
    %588 = vmatprep.subr.mxu0 0.0
    %589 = vmatpush1.msra.mxu0 %v533
    %590 = vmatprep.subr.mxu0 0.0
    %591 = vmatpush1.msra.mxu0 %v534
    %592 = vmatprep.subr.mxu0 0.0
    %593 = vmatpush1.msra.mxu0 %v535
    %594 = vmatprep.subr.mxu0 0.0
    %595 = vmatpush1.msra.mxu0 %v536
    %596 = vmatprep.subr.mxu0 0.0
    %597 = vmatpush1.msra.mxu0 %v537
    %598 = vmatprep.subr.mxu0 0.0
    %599 = vmatpush1.msra.mxu0 %v538
    %600 = vmatprep.subr.mxu0 0.0
    %601 = vmatpush1.msra.mxu0 %v539
    %602 = vmatprep.subr.mxu0 0.0
    %603 = vmatpush1.msra.mxu0 %v540
    %604 = vmatprep.subr.mxu0 0.0
    %605 = vmatpush1.msra.mxu0 %v541
    %606 = vmatprep.subr.mxu0 0.0
    %607 = vmatpush1.msra.mxu0 %v542
    %608 = vmatprep.mubr.f32.mxu0 %v510
    %609 = vmatmul.mubr.f32.gmra.mrb[0].mxu0 %v509
    %v610 = vpop.f32.mrb[0].mxu0
    %v611 = vadd.f32 %v543, %v610
    %v612 = vpop.f32.mrb[0].mxu0
    %613 = vdwg.mxu0
    %v614 = vmax.f32 %v611, 0.0
    %v615 = vld [vmem:[#allocation2 + $0x228] sm:$0xff]
    %v616 = vld [vmem:[#allocation2 + $0x238] sm:$0xff]
    %v617 = vld [vmem:[#allocation2 + $0x248] sm:$0xff]
    %v618 = vld [vmem:[#allocation2 + $0x258] sm:$0xff]
    %v619 = vld [vmem:[#allocation2 + $0x268] sm:$0xff]
    %v620 = vld [vmem:[#allocation2 + $0x278] sm:$0xff]
    %v621 = vld [vmem:[#allocation2 + $0x288] sm:$0xff]
    %v622 = vld [vmem:[#allocation2 + $0x298] sm:$0xff]
    %v623 = vld [vmem:[#allocation2 + $0x2a8] sm:$0xff]
    %v624 = vld [vmem:[#allocation2 + $0x2b8] sm:$0xff]
    %v625 = vld [vmem:[#allocation2 + $0x2c8] sm:$0xff]
    %v626 = vld [vmem:[#allocation2 + $0x2d8] sm:$0xff]
    %v627 = vld [vmem:[#allocation2 + $0x2e8] sm:$0xff]
    %v628 = vld [vmem:[#allocation2 + $0x2f8] sm:$0xff]
    %v629 = vld [vmem:[#allocation2 + $0x308] sm:$0xff]
    %v630 = vld [vmem:[#allocation2 + $0x318] sm:$0xff]
    %v631 = vld [vmem:[#allocation2 + $0x423] ss:$0 sm:$0xff]
    %632 = vmatprep.subr.mxu0 0.0
    %633 = vmatpush1.msra.mxu0 %v615
    %634 = vmatprep.subr.mxu0 0.0
    %635 = vmatpush1.msra.mxu0 %v616
    %636 = vmatprep.subr.mxu0 0.0
    %637 = vmatpush1.msra.mxu0 %v617
    %638 = vmatprep.subr.mxu0 0.0
    %639 = vmatpush1.msra.mxu0 %v618
    %640 = vmatprep.subr.mxu0 0.0
    %641 = vmatpush1.msra.mxu0 %v619
    %642 = vmatprep.subr.mxu0 0.0
    %643 = vmatpush1.msra.mxu0 %v620
    %644 = vmatprep.subr.mxu0 0.0
    %645 = vmatpush1.msra.mxu0 %v621
    %646 = vmatprep.subr.mxu0 0.0
    %647 = vmatpush1.msra.mxu0 %v622
    %648 = vmatprep.subr.mxu0 0.0
    %649 = vmatpush1.msra.mxu0 %v623
    %650 = vmatprep.subr.mxu0 0.0
    %651 = vmatpush1.msra.mxu0 %v624
    %652 = vmatprep.subr.mxu0 0.0
    %653 = vmatpush1.msra.mxu0 %v625
    %654 = vmatprep.subr.mxu0 0.0
    %655 = vmatpush1.msra.mxu0 %v626
    %656 = vmatprep.subr.mxu0 0.0
    %657 = vmatpush1.msra.mxu0 %v627
    %658 = vmatprep.subr.mxu0 0.0
    %659 = vmatpush1.msra.mxu0 %v628
    %660 = vmatprep.subr.mxu0 0.0
    %661 = vmatpush1.msra.mxu0 %v629
    %662 = vmatprep.subr.mxu0 0.0
    %663 = vmatpush1.msra.mxu0 %v630
    %664 = vmatprep.subr.mxu0 0.0
    %665 = vmatpush1.msra.mxu0 0.0
    %666 = vmatprep.subr.mxu0 0.0
    %667 = vmatpush1.msra.mxu0 0.0
    %668 = vmatprep.subr.mxu0 0.0
    %669 = vmatpush1.msra.mxu0 0.0
    %670 = vmatprep.subr.mxu0 0.0
    %671 = vmatpush1.msra.mxu0 0.0
    %672 = vmatprep.subr.mxu0 0.0
    %673 = vmatpush1.msra.mxu0 0.0
    %674 = vmatprep.subr.mxu0 0.0
    %675 = vmatpush1.msra.mxu0 0.0
    %676 = vmatprep.subr.mxu0 0.0
    %677 = vmatpush1.msra.mxu0 0.0
    %678 = vmatprep.subr.mxu0 0.0
    %679 = vmatpush1.msra.mxu0 0.0
    %680 = vmatprep.subr.mxu0 0.0
    %681 = vmatpush1.msra.mxu0 0.0
    %682 = vmatprep.subr.mxu0 0.0
    %683 = vmatpush1.msra.mxu0 0.0
    %684 = vmatprep.subr.mxu0 0.0
    %685 = vmatpush1.msra.mxu0 0.0
    %686 = vmatprep.subr.mxu0 0.0
    %687 = vmatpush1.msra.mxu0 0.0
    %688 = vmatprep.subr.mxu0 0.0
    %689 = vmatpush1.msra.mxu0 0.0
    %690 = vmatprep.subr.mxu0 0.0
    %691 = vmatpush1.msra.mxu0 0.0
    %692 = vmatprep.subr.mxu0 0.0
    %693 = vmatpush1.msra.mxu0 0.0
    %694 = vmatprep.subr.mxu0 0.0
    %695 = vmatpush1.msra.mxu0 0.0
    %696 = vmatprep.mubr.f32.mxu0 0.0
    %697 = vmatmul.mubr.f32.gmra.mrb[0].mxu0 %v614
    %v698 = vpop.f32.mrb[0].mxu0
    %v699 = vadd.f32 %v631, %v698
    %v700 = vpop.f32.mrb[0].mxu0
    %701 = vdwg.mxu0
    %702 = vst [vmem:[%s2] sm:$0xff] %v699
    // Predicated region
    $region14: #{forward.1} parent=1 // pred_check
      _
    $region15: #{forward.1} parent=1 // pred_check_branch
      %704 = sbr.rel (0) target = $region17
    $region16: #{forward.1} parent=1 // pred_region
      _
    $region17: #{forward.1} parent=1 // pred_fallthru
      _
    // Predicated region
    $region18: #{forward.1} parent=1 // pred_check
      _
    $region19: #{forward.1} parent=1 // pred_check_branch
      %706 = sbr.rel (0) target = $region21
    $region20: #{forward.1} parent=1 // pred_region
      _
    $region21: #{forward.1} parent=1 // pred_fallthru
      _
    %707 = vsyncpa [#allocation3], 1

</llo_original>
